<compile_context>
chip_gen: v6e
topology: v6e:2x2x1
jax: 0.10.0
libtpu: 0.0.40
codegen_flags: <defaults>
</compile_context>

<pallas_src>
import functools
import math

import jax
import jax.numpy as jnp
from jax.experimental import pallas as pl
from jax.experimental.pallas import tpu as pltpu


def _label_smoothing_kernel(x_ref, tgt_ref, loss_ref, *tdist_refs,
                            padding_idx, confidence, smooth_val):
    j = pl.program_id(1)

    # Zero this N-block's partial-loss accumulator at the start of the V sweep.
    @pl.when(j == 0)
    def _():
        loss_ref[...] = jnp.zeros_like(loss_ref)

    x = x_ref[...]                                   # (bn, bv) f32 log-probs
    tgt = tgt_ref[...]                               # (bn, 1)  i32 labels
    bn, bv = x.shape

    # Global column index for this V tile.
    col = jax.lax.broadcasted_iota(jnp.int32, (bn, bv), 1) + j * bv

    # Fused masks: scatter(confidence) / fill(smooth) / zero padding col & rows.
    m_tgt = col == tgt
    m_zero = (col == jnp.int32(padding_idx)) | (tgt == jnp.int32(padding_idx))
    true_dist = jnp.where(m_zero, jnp.float32(0.0),
                          jnp.where(m_tgt, jnp.float32(confidence),
                                    jnp.float32(smooth_val)))

    if tdist_refs:                                   # optional true_dist output
        tdist_refs[0][...] = true_dist.astype(tdist_refs[0].dtype)

    # KL cross term only: sum(true_dist * x).  (td already has zeros at the
    # padding column / padded rows.)  The entropy term sum(td*log td) is a
    # compile-time constant per valid row, added in the wrapper -> no EUP log.
    contrib = true_dist * x
    # Fold (bn, bv) -> (8, bv) with tile-aligned vreg-wise VPU adds only; the
    # final cross-lane reduction happens once on the tiny partials in JAX.
    fold = contrib.reshape(bn // 8, 8, bv).sum(axis=0)
    loss_ref[...] = loss_ref[...] - fold             # accumulates -sum(td * x)


def _pick_block(dim, target, quantum):
    """Largest block <= target that divides dim and is a multiple of quantum
    (or the full dim if dim <= target / no such divisor exists)."""
    if dim <= target:
        return dim
    b = (target // quantum) * quantum
    while b >= quantum:
        if dim % b == 0:
            return b
        b -= quantum
    return dim


def label_smoothing_loss(x, target, *, size, padding_idx, smoothing,
                         block_n=None, block_v=None, return_true_dist=True):
    """x: (N, V) f32 log-probs, target: (N,) int.

    Returns (loss_scalar, true_dist) where true_dist is None when
    return_true_dist=False (loss-only fast path, skips the (N, V) HBM write).
    """
    n, v = x.shape
    assert v == size
    # TODO(synk): remainder handling for ragged N (N % 8 != 0).
    assert n % 8 == 0

    if block_n is None:
        block_n = _pick_block(n, 512, 8)
    if block_v is None:
        block_v = _pick_block(v, 2048, 128)
    assert n % block_n == 0 and block_n % 8 == 0
    assert v % block_v == 0 and (block_v % 128 == 0 or block_v == v)

    n_blocks = n // block_n
    v_blocks = v // block_v

    tgt2d = target.astype(jnp.int32).reshape(n, 1)
    confidence = 1.0 - smoothing
    smooth_val = smoothing / (size - 2)

    kernel = functools.partial(_label_smoothing_kernel,
                               padding_idx=padding_idx,
                               confidence=confidence,
                               smooth_val=smooth_val)

    # Per-N-block partial losses, one resident (8, block_v) slab per block.
    out_shape = [jax.ShapeDtypeStruct((n_blocks * 8, block_v), jnp.float32)]
    out_specs = [pl.BlockSpec((8, block_v), lambda i, j: (i, 0))]
    if return_true_dist:
        out_shape.append(jax.ShapeDtypeStruct((n, v), jnp.float32))
        out_specs.append(pl.BlockSpec((block_n, block_v), lambda i, j: (i, j)))

    # Generation-safe VMEM budget (headroom for v7x's 64 MiB physical VMEM).
    tile_bytes = block_n * block_v * 4
    vmem_limit = int(min(64 * 1024 * 1024,
                         max(32 * 1024 * 1024, 8 * tile_bytes)))

    outs = pl.pallas_call(
        kernel,
        out_shape=tuple(out_shape),
        grid_spec=pltpu.PrefetchScalarGridSpec(
            num_scalar_prefetch=0,
            grid=(n_blocks, v_blocks),
            in_specs=[
                pl.BlockSpec((block_n, block_v), lambda i, j: (i, j)),
                pl.BlockSpec((block_n, 1), lambda i, j: (i, 0)),
            ],
            out_specs=out_specs,
        ),
        compiler_params=pltpu.CompilerParams(
            # N blocks independent -> both TCs on v7x; V carries the accumulator.
            dimension_semantics=("parallel", "arbitrary"),
            vmem_limit_bytes=vmem_limit),
    )(x, tgt2d)

    if return_true_dist:
        partial, true_dist = outs
    else:
        partial = outs[0] if isinstance(outs, (tuple, list)) else outs
        true_dist = None

    # Analytic entropy constant per valid (non-padding) row:
    #   C = conf*log(conf) + (size-2)*smooth*log(smooth)
    ent = 0.0
    if confidence > 0.0:
        ent += confidence * math.log(confidence)
    if smooth_val > 0.0 and size > 2:
        ent += (size - 2) * smooth_val * math.log(smooth_val)
    num_valid = jnp.sum((target != padding_idx).astype(jnp.float32))

    # KL(sum) = sum(td*log td) - sum(td*x) = num_valid*C + sum(partials)
    loss = jnp.sum(partial) + num_valid * jnp.float32(ent)
    return loss, true_dist


def _reference(x, target, *, size, padding_idx, smoothing):
    n, v = x.shape
    confidence = 1.0 - smoothing
    smooth_val = smoothing / (size - 2)
    col = jnp.arange(v)[None, :]
    tgt = target[:, None]
    td = jnp.where(col == tgt, confidence, smooth_val)
    td = jnp.where(col == padding_idx, 0.0, td)
    td = jnp.where(tgt == padding_idx, 0.0, td)
    loss = jnp.sum(jnp.where(td > 0.0, td * (jnp.log(td) - x), 0.0))
    return loss, td


if __name__ == "__main__":
    SIZE = 256         # vocab size (== x.size(1))
    N = 16             # number of tokens (batch * seq)
    PADDING_IDX = 0
    SMOOTHING = 0.1

    key = jax.random.PRNGKey(0)
    k1, k2 = jax.random.split(key)

    logits = jax.random.normal(k1, (N, SIZE), dtype=jnp.float32)
    x = jax.nn.log_softmax(logits, axis=-1)          # KLDivLoss expects log-probs
    target = jax.random.randint(k2, (N,), 0, SIZE, dtype=jnp.int32)
    target = target.at[3].set(PADDING_IDX)           # exercise padding-row masking

    # Small explicit tiles so both grid axes (N parallel, V arbitrary) are used.
    loss, true_dist = label_smoothing_loss(
        x, target, size=SIZE, padding_idx=PADDING_IDX, smoothing=SMOOTHING,
        block_n=8, block_v=128)
    jax.block_until_ready((loss, true_dist))

    ref_loss, ref_td = _reference(x, target, size=SIZE,
                                  padding_idx=PADDING_IDX, smoothing=SMOOTHING)
    assert jnp.allclose(loss, ref_loss, rtol=1e-5, atol=1e-5)
    assert jnp.allclose(true_dist, ref_td, rtol=1e-6, atol=1e-6)

    # Loss-only fast path (skips the true_dist HBM write), default tiling.
    loss2, _ = label_smoothing_loss(
        x, target, size=SIZE, padding_idx=PADDING_IDX, smoothing=SMOOTHING,
        return_true_dist=False)
    jax.block_until_ready(loss2)
    assert jnp.allclose(loss2, ref_loss, rtol=1e-5, atol=1e-5)

    print("KERNEL_OK")
</pallas_src>

<mosaic_0001>
module attributes {stable_mosaic.version = 11 : i64} {
  func.func @_label_smoothing_kernel(%arg0: i32, %arg1: i32, %arg2: memref<8x128xf32, #tpu.memory_space<vmem>>, %arg3: memref<8x1xi32, #tpu.memory_space<vmem>>, %arg4: memref<8x128xf32, #tpu.memory_space<vmem>>, %arg5: memref<8x128xf32, #tpu.memory_space<vmem>>) attributes {dimension_semantics = [#tpu.dimension_semantics<parallel>, #tpu.dimension_semantics<arbitrary>], iteration_bounds = array<i64: 2, 2>, scalar_prefetch = 0 : i64, scratch_operands = 0 : i64, tpu.core_type = #tpu.core_type<tc>, window_params = [{transform_indices = @transform_0, window_bounds = array<i64: 8, 128>}, {transform_indices = @transform_1, window_bounds = array<i64: 8, 1>}, {transform_indices = @transform_2, window_bounds = array<i64: 8, 128>}, {transform_indices = @transform_3, window_bounds = array<i64: 8, 128>}]} {
    %c0_i32 = arith.constant 0 : i32
    %0 = arith.cmpi eq, %arg1, %c0_i32 : i32
    %1 = arith.extui %0 : i1 to i32
    %c0_i32_0 = arith.constant 0 : i32
    %2 = arith.cmpi ne, %1, %c0_i32_0 : i32
    scf.if %2 {
      %cst_15 = arith.constant 0.000000e+00 : f32
      %29 = vector.broadcast %cst_15 : f32 to vector<8x128xf32>
      %c0_16 = arith.constant 0 : index
      %c0_17 = arith.constant 0 : index
      %30 = vector.load %arg4[%c0_16, %c0_17] : memref<8x128xf32, #tpu.memory_space<vmem>>, vector<8x128xf32>
      tpu.vector_store %arg4[%c0_16, %c0_17], %29 {strides = array<i32>} : memref<8x128xf32, #tpu.memory_space<vmem>>, vector<8x128xf32>,
    } else {
    }
    %c0 = arith.constant 0 : index
    %c0_1 = arith.constant 0 : index
    %3 = vector.load %arg2[%c0, %c0_1] : memref<8x128xf32, #tpu.memory_space<vmem>>, vector<8x128xf32>
    %c0_2 = arith.constant 0 : index
    %c0_3 = arith.constant 0 : index
    %4 = vector.load %arg3[%c0_2, %c0_3] : memref<8x1xi32, #tpu.memory_space<vmem>>, vector<8x1xi32>
    %5 = tpu.iota {dimensions = array<i32: 1>} : vector<8x128xi32>
    %c128_i32 = arith.constant 128 : i32
    %6 = arith.muli %arg1, %c128_i32 : i32
    %7 = vector.broadcast %6 : i32 to vector<8x128xi32>
    %8 = arith.addi %5, %7 : vector<8x128xi32>
    %9 = vector.broadcast %4 : vector<8x1xi32> to vector<8x128xi32>
    %10 = arith.cmpi eq, %8, %9 : vector<8x128xi32>
    %c0_i32_4 = arith.constant 0 : i32
    %11 = vector.broadcast %c0_i32_4 : i32 to vector<8x128xi32>
    %12 = arith.cmpi eq, %8, %11 : vector<8x128xi32>
    %c0_i32_5 = arith.constant 0 : i32
    %13 = vector.broadcast %c0_i32_5 : i32 to vector<8x1xi32>
    %14 = arith.cmpi eq, %4, %13 : vector<8x1xi32>
    %15 = vector.broadcast %14 : vector<8x1xi1> to vector<8x128xi1>
    %16 = arith.ori %12, %15 : vector<8x128xi1>
    %cst = arith.constant 0.899999976 : f32
    %cst_6 = arith.constant 3.93700786E-4 : f32
    %17 = vector.broadcast %cst : f32 to vector<8x128xf32>
    %18 = vector.broadcast %cst_6 : f32 to vector<8x128xf32>
    %19 = arith.select %10, %17, %18 : vector<8x128xi1>, vector<8x128xf32>
    %cst_7 = arith.constant 0.000000e+00 : f32
    %20 = vector.broadcast %cst_7 : f32 to vector<8x128xf32>
    %21 = arith.select %16, %20, %19 : vector<8x128xi1>, vector<8x128xf32>
    %c0_8 = arith.constant 0 : index
    %c0_9 = arith.constant 0 : index
    %22 = vector.load %arg5[%c0_8, %c0_9] : memref<8x128xf32, #tpu.memory_space<vmem>>, vector<8x128xf32>
    tpu.vector_store %arg5[%c0_8, %c0_9], %21 {strides = array<i32>} : memref<8x128xf32, #tpu.memory_space<vmem>>, vector<8x128xf32>,
    %23 = arith.mulf %21, %3 : vector<8x128xf32>
    %24 = vector.shape_cast %23 : vector<8x128xf32> to vector<1x8x128xf32>
    %cst_10 = arith.constant dense<0.000000e+00> : vector<8x128xf32>
    %25 = vector.multi_reduction <add>, %24, %cst_10 [0] : vector<1x8x128xf32> to vector<8x128xf32>
    %c0_11 = arith.constant 0 : index
    %c0_12 = arith.constant 0 : index
    %26 = vector.load %arg4[%c0_11, %c0_12] : memref<8x128xf32, #tpu.memory_space<vmem>>, vector<8x128xf32>
    %27 = arith.subf %26, %25 : vector<8x128xf32>
    %c0_13 = arith.constant 0 : index
    %c0_14 = arith.constant 0 : index
    %28 = vector.load %arg4[%c0_13, %c0_14] : memref<8x128xf32, #tpu.memory_space<vmem>>, vector<8x128xf32>
    tpu.vector_store %arg4[%c0_13, %c0_14], %27 {strides = array<i32>} : memref<8x128xf32, #tpu.memory_space<vmem>>, vector<8x128xf32>,
    return
  }
  func.func @transform_0(%arg0: i32, %arg1: i32) -> (i32, i32) {
    %c0_i32 = arith.constant 0 : i32
    return %arg0, %arg1 : i32, i32
  }
  func.func @transform_1(%arg0: i32, %arg1: i32) -> (i32, i32) {
    %c0_i32 = arith.constant 0 : i32
    %c0_i32_0 = arith.constant 0 : i32
    return %arg0, %c0_i32 : i32, i32
  }
  func.func @transform_2(%arg0: i32, %arg1: i32) -> (i32, i32) {
    %c0_i32 = arith.constant 0 : i32
    %c0_i32_0 = arith.constant 0 : i32
    return %arg0, %c0_i32 : i32, i32
  }
  func.func @transform_3(%arg0: i32, %arg1: i32) -> (i32, i32) {
    %c0_i32 = arith.constant 0 : i32
    return %arg0, %arg1 : i32, i32
  }
}

</mosaic_0001>

<llo_original>
// kernel: tpu_custom_call.1
$region0: #{tpu_custom_call.1}
  #allocation0 [shape = 'u32[]', space=smem, size = 0x4, offset = 0x4, fixed_abs, tag = 'smem constant byte address 0x4 - core index']
  #allocation1 [shape = 'u32[144,128]{1,0:T(1,128)}', space=vmem, size = 0x12000, scoped, tag = 'internal scratch']
  %s0 = inlined_call_operand.hbm [shape: f32[16,256], index: 0, kind: input, shape index: {}]
  %s1 = inlined_call_operand.vmem [shape: s32[16,1], index: 1, kind: input, shape index: {}]
  %s2 = inlined_call_operand.hbm [shape: f32[16,128], index: 2, kind: output, shape index: {0}]
  %s3 = inlined_call_operand.hbm [shape: f32[16,256], index: 3, kind: output, shape index: {1}]
  %4 = xla_tuple %s2, %s3
  %s5 = sld [smem:[#allocation0]]
  $region57: #{tpu_custom_call.1} parent=0
    _
  %s7 = ssub.s32 1, %s5
  %s8 = scalar_select 0, %s7, %s5
  $region1: #{tpu_custom_call.1} parent=0
    #allocation2 [shape = 'u8[8192]{0}', space=vmem, size = 0x2000, scoped, tag = 'input window, operand 0']
    #allocation3 [shape = 's32[2]{0}', space=sflag, size = 0x8, scoped, tag = 'scoped memory for tpu_custom_call.1']
    #allocation4 [shape = 's32[2]{0}', space=sflag, size = 0x8, scoped, tag = 'scoped memory for tpu_custom_call.1']
    #allocation5 [shape = 'u8[8192]{0}', space=vmem, size = 0x2000, scoped, tag = 'output window, operand 0']
    #allocation6 [shape = 'u8[8192]{0}', space=vmem, size = 0x2000, scoped, tag = 'output window, operand 1']
    #allocation7 [shape = 's32[2]{0}', space=sflag, size = 0x8, scoped, tag = 'scoped memory for tpu_custom_call.1']
    %9 = vsyncpa [#allocation3], 0
    %s10 = scalar_lea.sflag [#allocation3], 1
    %11 = vsyncpa %s10, 0
    %12 = vsyncpa [#allocation4], 0
    %s13 = scalar_lea.sflag [#allocation4], 1
    %14 = vsyncpa %s13, 0
    %15 = vsyncpa [#allocation7], 0
    %s16 = scalar_lea.sflag [#allocation7], 1
    %17 = vsyncpa %s16, 0
    loop: start=0, step=1, limit=6
    $region2: #{tpu_custom_call.1} parent=1 // loop_pre_header
      _
    $region3: #{tpu_custom_call.1} parent=1 // loop_header
      %s19 = sphi 0, %s23
      %p20 = scmp.ge.s32.totalorder %s19, 6
      %s26 = sphi 0, %s38
      %s27 = sphi 0, %s34
      %s28 = sphi 0, %s26
      %s29 = sphi 0, %s27
      %s30 = sphi 0, %s28
      %s31 = sphi 0, %s29
      %s43 = sphi 0, %s45
      %s46 = sphi 0, %s43
      %s47 = sphi 0, %s46
      %s63 = sphi 0, %s47
      %s69 = sphi 0, %s71
      %s72 = sphi 0, %s69
      %s73 = sphi 0, %s72
      %s89 = sphi 0, %s73
      %s95 = sphi 0, %s97
      %s98 = sphi 0, %s95
      %s99 = sphi 0, %s98
      %s115 = sphi 0, %s99
      %s123 = sphi 0, %s125
      %s126 = sphi 0, %s123
      %s127 = sphi 0, %s126
      %s143 = sphi 0, %s127
    $region4: #{tpu_custom_call.1} parent=1 // loop_header_branch
      %22 = sbr.rel (%p20) target = $region8
    $region5: #{tpu_custom_call.1} parent=1 // loop_body
      %s24 = ssub.s32 %s19, 1
      %s25 = ssub.s32 %s19, 2
      %s32 = sadd.s32 1, %s27
      %p33 = scmp.ge.s32.totalorder %s32, 2
      %s34 = scalar_select %p33, 0, %s32
      %s35 = sadd.s32 1, %s26
      %s36 = scalar_select %p33, %s35, %s26
      %p37 = scmp.ge.s32.totalorder %s36, 2
      %s38 = scalar_select %p37, 0, %s36
      %s39 = ssub.s32 %s26, %s38
      %s40 = ssub.s32 %s27, %s34
      %s41 = sor.u32 %s39, %s40
      %p42 = scmp.eq.s32.totalorder %s41, 0
      %s44 = sadd.s32 %s43, 1
      %s45 = scalar_select %p42, %s43, %s44
      %p48 = pneg %p42
      %p49 = scmp.eq.s32.totalorder %s19, 3
      %p50 = por %p48, %p49
      %p51 = scmp.ne.s32.totalorder %s43, %s46
      %p52 = scmp.eq.s32.totalorder %s19, 0
      %p53 = por %p51, %p52
      %p54 = scmp.ne.s32.totalorder %s43, %s46
      %p55 = scmp.eq.s32.totalorder %s24, 3
      %p56 = por %p54, %p55
      %p57 = scmp.ne.s32.totalorder %s46, %s47
      %p58 = scmp.eq.s32.totalorder %s24, 0
      %p59 = por %p57, %p58
      %p60 = scmp.ne.s32.totalorder %s46, %s47
      %p61 = scmp.eq.s32.totalorder %s25, 3
      %p62 = por %p60, %p61
      %p64 = scmp.ne.s32.totalorder %s47, %s63
      %p65 = scmp.eq.s32.totalorder %s25, 0
      %p66 = por %p64, %p65
      %s67 = ssub.s32 %s26, %s38
      %p68 = scmp.eq.s32.totalorder %s67, 0
      %s70 = sadd.s32 %s69, 1
      %s71 = scalar_select %p68, %s69, %s70
      %p74 = pneg %p68
      %p75 = scmp.eq.s32.totalorder %s19, 3
      %p76 = por %p74, %p75
      %p77 = scmp.ne.s32.totalorder %s69, %s72
      %p78 = scmp.eq.s32.totalorder %s19, 0
      %p79 = por %p77, %p78
      %p80 = scmp.ne.s32.totalorder %s69, %s72
      %p81 = scmp.eq.s32.totalorder %s24, 3
      %p82 = por %p80, %p81
      %p83 = scmp.ne.s32.totalorder %s72, %s73
      %p84 = scmp.eq.s32.totalorder %s24, 0
      %p85 = por %p83, %p84
      %p86 = scmp.ne.s32.totalorder %s72, %s73
      %p87 = scmp.eq.s32.totalorder %s25, 3
      %p88 = por %p86, %p87
      %p90 = scmp.ne.s32.totalorder %s73, %s89
      %p91 = scmp.eq.s32.totalorder %s25, 0
      %p92 = por %p90, %p91
      %s93 = ssub.s32 %s26, %s38
      %p94 = scmp.eq.s32.totalorder %s93, 0
      %s96 = sadd.s32 %s95, 1
      %s97 = scalar_select %p94, %s95, %s96
      %p100 = pneg %p94
      %p101 = scmp.eq.s32.totalorder %s19, 3
      %p102 = por %p100, %p101
      %p103 = scmp.ne.s32.totalorder %s95, %s98
      %p104 = scmp.eq.s32.totalorder %s19, 0
      %p105 = por %p103, %p104
      %p106 = scmp.ne.s32.totalorder %s95, %s98
      %p107 = scmp.eq.s32.totalorder %s24, 3
      %p108 = por %p106, %p107
      %p109 = scmp.ne.s32.totalorder %s98, %s99
      %p110 = scmp.eq.s32.totalorder %s24, 0
      %p111 = por %p109, %p110
      %p112 = scmp.ne.s32.totalorder %s98, %s99
      %p113 = scmp.eq.s32.totalorder %s25, 3
      %p114 = por %p112, %p113
      %p116 = scmp.ne.s32.totalorder %s99, %s115
      %p117 = scmp.eq.s32.totalorder %s25, 0
      %p118 = por %p116, %p117
      %s119 = ssub.s32 %s26, %s38
      %s120 = ssub.s32 %s27, %s34
      %s121 = sor.u32 %s119, %s120
      %p122 = scmp.eq.s32.totalorder %s121, 0
      %s124 = sadd.s32 %s123, 1
      %s125 = scalar_select %p122, %s123, %s124
      %p128 = pneg %p122
      %p129 = scmp.eq.s32.totalorder %s19, 3
      %p130 = por %p128, %p129
      %p131 = scmp.ne.s32.totalorder %s123, %s126
      %p132 = scmp.eq.s32.totalorder %s19, 0
      %p133 = por %p131, %p132
      %p134 = scmp.ne.s32.totalorder %s123, %s126
      %p135 = scmp.eq.s32.totalorder %s24, 3
      %p136 = por %p134, %p135
      %p137 = scmp.ne.s32.totalorder %s126, %s127
      %p138 = scmp.eq.s32.totalorder %s24, 0
      %p139 = por %p137, %p138
      %p140 = scmp.ne.s32.totalorder %s126, %s127
      %p141 = scmp.eq.s32.totalorder %s25, 3
      %p142 = por %p140, %p141
      %p144 = scmp.ne.s32.totalorder %s127, %s143
      %p145 = scmp.eq.s32.totalorder %s25, 0
      %p146 = por %p144, %p145
      %p147 = scmp.le.s32.totalorder 1, %s19
      %p148 = scmp.lt.s32.totalorder %s19, 5
      %p149 = pnand %p147, %p148
      %p150 = pneg %p149
      // Predicated region
      $region9: #{tpu_custom_call.1} parent=5 // pred_check
        _
      $region10: #{tpu_custom_call.1} parent=5 // pred_check_branch
        %152 = sbr.rel (%p149) target = $region12
      $region11: #{tpu_custom_call.1} parent=5 // pred_region
        %s153 = ssub.s32 %s19, 1
      $region12: #{tpu_custom_call.1} parent=5 // pred_fallthru
        _
      %p154 = scmp.lt.s32.totalorder %s19, 4
      // Predicated region
      $region13: #{tpu_custom_call.1} parent=5 // pred_check
        %p155 = pneg %p154
      $region14: #{tpu_custom_call.1} parent=5 // pred_check_branch
        %157 = sbr.rel (%p155) target = $region16
      $region15: #{tpu_custom_call.1} parent=5 // pred_region
        // Predicated region
        $region17: #{tpu_custom_call.1} parent=15 // pred_check
          %p158 = pneg %p53
        $region18: #{tpu_custom_call.1} parent=15 // pred_check_branch
          %160 = sbr.rel (%p158) target = $region20
        $region19: #{tpu_custom_call.1} parent=15 // pred_region
          %s161 = sand.u32 %s43, 1
          %s162 = scalar_lea.sflag [#allocation3], %s161
          %s163 = sand.u32 %s43, 1
          %s164 = smul.addr %s163, 8
          %s165 = scalar_lea.vmem [#allocation2], %s164
          %s167 = ssub.s32 128, 128
          %168 = vsyncadd %s162, %s167
          %s169 = smul.addr %s26, 2
          %s170 = sadd.s32 %s27, %s169
          %s171 = smul.addr %s170, 128
          %s172 = scalar_lea.hbm %s0, %s171
          %s174 = sshll.u32 %s165, 4
          %s175 = int_to_ptr.vmem [resolvable:$true] %s174
          %177 = dma.hbm_to_vmem [thread:$0]  %s172, 128, %s175, %s162
        $region20: #{tpu_custom_call.1} parent=15 // pred_fallthru
          _
        // Predicated region
        $region21: #{tpu_custom_call.1} parent=15 // pred_check
          %p178 = pneg %p79
        $region22: #{tpu_custom_call.1} parent=15 // pred_check_branch
          %180 = sbr.rel (%p178) target = $region24
        $region23: #{tpu_custom_call.1} parent=15 // pred_region
          %p181 = scmp.lt.s32.totalorder %s26, 1
          %s182 = scalar_select %p181, %s26, 1
          %s183 = smul.addr %s182, 8
          %s184 = scalar_lea.vmem %s1, %s183
        $region24: #{tpu_custom_call.1} parent=15 // pred_fallthru
          _
      $region16: #{tpu_custom_call.1} parent=5 // pred_fallthru
        _
      %p185 = scmp.le.s32.totalorder 1, %s19
      %p186 = scmp.lt.s32.totalorder %s19, 5
      %p187 = pnand %p185, %p186
      %p188 = pneg %p187
      // Predicated region
      $region25: #{tpu_custom_call.1} parent=5 // pred_check
        _
      $region26: #{tpu_custom_call.1} parent=5 // pred_check_branch
        %190 = sbr.rel (%p187) target = $region28
      $region27: #{tpu_custom_call.1} parent=5 // pred_region
        %s191 = ssub.s32 %s19, 1
        %s192 = sand.u32 %s46, 1
        %s193 = scalar_lea.sflag [#allocation3], %s192
        %s194 = sand.u32 %s46, 1
        %s195 = smul.addr %s194, 8
        %s196 = scalar_lea.vmem [#allocation2], %s195
        // Predicated region
        $region29: #{tpu_custom_call.1} parent=27 // pred_check
          %p197 = pneg %p59
        $region30: #{tpu_custom_call.1} parent=27 // pred_check_branch
          %199 = sbr.rel (%p197) target = $region32
        $region31: #{tpu_custom_call.1} parent=27 // pred_region
          %200 = dma.done %s193, 128
        $region32: #{tpu_custom_call.1} parent=27 // pred_fallthru
          _
        %s201 = sand.u32 %s46, 1
        %s202 = scalar_lea.sflag [#allocation3], %s201
        %s203 = sand.u32 %s46, 1
        %s204 = smul.addr %s203, 8
        %s205 = scalar_lea.vmem [#allocation2], %s204
        %p206 = pneg %p59
        %p207 = pneg %p56
        %p208 = scmp.lt.s32.totalorder %s28, 1
        %s209 = scalar_select %p208, %s28, 1
        %s210 = smul.addr %s209, 8
        %s211 = scalar_lea.vmem %s1, %s210
        %p212 = pneg %p85
        %p213 = pneg %p82
        %p214 = pneg %p111
        %p215 = pneg %p108
        %s216 = sand.u32 %s98, 1
        %s217 = scalar_lea.sflag [#allocation4], %s216
        %s218 = sand.u32 %s98, 1
        %s219 = smul.addr %s218, 8
        %s220 = scalar_lea.vmem [#allocation5], %s219
        %p221 = pneg %p139
        %p222 = pneg %p136
        %s223 = sand.u32 %s126, 1
        %s224 = scalar_lea.sflag [#allocation7], %s223
        %s225 = sand.u32 %s126, 1
        %s226 = smul.addr %s225, 8
        %s227 = scalar_lea.vmem [#allocation6], %s226
        %p228 = scmp.lt.s32.totalorder %s28, 1
        %s229 = scalar_select %p228, %s28, 1
        %s230 = smul.addr %s229, 8
        %s231 = scalar_lea.vmem %s1, %s230
        %p232 = scmp.eq.s32.totalorder %s29, 0
        // Predicated region
        $region33: #{tpu_custom_call.1} parent=27 // pred_check
          %p233 = pneg %p232
        $region34: #{tpu_custom_call.1} parent=27 // pred_check_branch
          %235 = sbr.rel (%p233) target = $region36
        $region35: #{tpu_custom_call.1} parent=27 // pred_region
          %236 = vst [vmem:[%s220] sm:$0xff] 0.0
        $region36: #{tpu_custom_call.1} parent=27 // pred_fallthru
          _
        %v237 = vld [vmem:[%s196] sm:$0xff]
        %v238 = vld [vmem:[%s231] sm:$0xff]
        %v239 = vlaneseq
        %v240 = vand.u32 %v239, 127
        %s241 = smul.u32 %s29, 128
        %v242 = vstv %s241
        %v243 = vadd.s32 %v240, %v242
        %244 = vset.pattern.permute.xlu0 0
        %245 = vperm.xlu0 %244, %v238
        %v246 = vpop.permute.xlu0 %245
        %vm247 = vcmp.eq.s32.totalorder %v243, %v246
        %vm248 = vcmp.eq.s32.totalorder %v243, 0
        %vm249 = vcmp.eq.s32.totalorder %v238, 0
        %v250 = vsel %vm249, 1, 0
        %251 = vset.pattern.permute.xlu0 0
        %252 = vperm.xlu0 %251, %v250
        %v253 = vpop.permute.xlu0 %252
        %vm254 = vcmp.eq.s32.totalorder %v253, 1
        %vm255 = vmor %vm248, %vm254
        %v256 = vsel %vm247, 0.9, 0.0003937008
        %v257 = vsel %vm255, 0.0, %v256
        %258 = vst [vmem:[%s227] sm:$0xff] %v257
        %v259 = vmul.f32 %v257, %v237
        %v260 = vadd.f32 %v259, 0.0
        %v261 = vld [vmem:[%s220] sm:$0xff]
        %v262 = vsub.f32 %v261, %v260
        %263 = vst [vmem:[%s220] sm:$0xff] %v262
        %s264 = sand.u32 %s98, 1
        %s265 = scalar_lea.sflag [#allocation4], %s264
        %s266 = sand.u32 %s98, 1
        %s267 = smul.addr %s266, 8
        %s268 = scalar_lea.vmem [#allocation5], %s267
        %s269 = sand.u32 %s126, 1
        %s270 = scalar_lea.sflag [#allocation7], %s269
        %s271 = sand.u32 %s126, 1
        %s272 = smul.addr %s271, 8
        %s273 = scalar_lea.vmem [#allocation6], %s272
        // Predicated region
        $region37: #{tpu_custom_call.1} parent=27 // pred_check
          %p274 = pneg %p108
        $region38: #{tpu_custom_call.1} parent=27 // pred_check_branch
          %276 = sbr.rel (%p274) target = $region40
        $region39: #{tpu_custom_call.1} parent=27 // pred_region
          %s278 = ssub.s32 128, 128
          %279 = vsyncadd %s265, %s278
          %s280 = smul.addr %s28, 128
          %s281 = scalar_lea.hbm %s2, %s280
          %s283 = sshll.u32 %s268, 4
          %s284 = int_to_ptr.vmem [resolvable:$true] %s283
          %286 = dma.vmem_to_hbm [thread:$0]  %s284, 128, %s281, %s265
        $region40: #{tpu_custom_call.1} parent=27 // pred_fallthru
          _
        // Predicated region
        $region41: #{tpu_custom_call.1} parent=27 // pred_check
          %p287 = pneg %p136
        $region42: #{tpu_custom_call.1} parent=27 // pred_check_branch
          %289 = sbr.rel (%p287) target = $region44
        $region43: #{tpu_custom_call.1} parent=27 // pred_region
          %s291 = ssub.s32 128, 128
          %292 = vsyncadd %s270, %s291
          %s293 = smul.addr %s28, 2
          %s294 = sadd.s32 %s29, %s293
          %s295 = smul.addr %s294, 128
          %s296 = scalar_lea.hbm %s3, %s295
          %s298 = sshll.u32 %s273, 4
          %s299 = int_to_ptr.vmem [resolvable:$true] %s298
          %301 = dma.vmem_to_hbm [thread:$0]  %s299, 128, %s296, %s270
        $region44: #{tpu_custom_call.1} parent=27 // pred_fallthru
          _
      $region28: #{tpu_custom_call.1} parent=5 // pred_fallthru
        _
      %p302 = scmp.le.s32.totalorder 2, %s19
      // Predicated region
      $region45: #{tpu_custom_call.1} parent=5 // pred_check
        %p303 = pneg %p302
      $region46: #{tpu_custom_call.1} parent=5 // pred_check_branch
        %305 = sbr.rel (%p303) target = $region48
      $region47: #{tpu_custom_call.1} parent=5 // pred_region
        %s306 = ssub.s32 %s19, 2
        // Predicated region
        $region49: #{tpu_custom_call.1} parent=47 // pred_check
          %p307 = pneg %p114
        $region50: #{tpu_custom_call.1} parent=47 // pred_check_branch
          %309 = sbr.rel (%p307) target = $region52
        $region51: #{tpu_custom_call.1} parent=47 // pred_region
          %s310 = sand.u32 %s99, 1
          %s311 = scalar_lea.sflag [#allocation4], %s310
          %s312 = sand.u32 %s99, 1
          %s313 = smul.addr %s312, 8
          %s314 = scalar_lea.vmem [#allocation5], %s313
          %315 = dma.done %s311, 128
        $region52: #{tpu_custom_call.1} parent=47 // pred_fallthru
          _
        // Predicated region
        $region53: #{tpu_custom_call.1} parent=47 // pred_check
          %p316 = pneg %p142
        $region54: #{tpu_custom_call.1} parent=47 // pred_check_branch
          %318 = sbr.rel (%p316) target = $region56
        $region55: #{tpu_custom_call.1} parent=47 // pred_region
          %s319 = sand.u32 %s127, 1
          %s320 = scalar_lea.sflag [#allocation7], %s319
          %s321 = sand.u32 %s127, 1
          %s322 = smul.addr %s321, 8
          %s323 = scalar_lea.vmem [#allocation6], %s322
          %324 = dma.done %s320, 128
        $region56: #{tpu_custom_call.1} parent=47 // pred_fallthru
          _
      $region48: #{tpu_custom_call.1} parent=5 // pred_fallthru
        _
    $region6: #{tpu_custom_call.1} parent=1 // loop_footer
      %s23 = sadd.s32 1, %s19
    $region7: #{tpu_custom_call.1} parent=1 // loop_footer_branch
      %18 = sbr.rel target = $region3
    $region8: #{tpu_custom_call.1} parent=1 // loop_exit
      _
    %325 = vsyncpa [#allocation3], 1
    %s326 = scalar_lea.sflag [#allocation3], 1
    %327 = vsyncpa %s326, 1
    %328 = vsyncpa [#allocation4], 1
    %s329 = scalar_lea.sflag [#allocation4], 1
    %330 = vsyncpa %s329, 1
    %331 = vsyncpa [#allocation7], 1
    %s332 = scalar_lea.sflag [#allocation7], 1
    %333 = vsyncpa %s332, 1

</llo_original>
